<compile_context>
chip_gen: v6e
topology: v6e:2x2x1
jax: 0.10.0
libtpu: 0.0.40
codegen_flags: <defaults>
</compile_context>

<pallas_src>
import functools

import jax
import jax.numpy as jnp
from jax.experimental import pallas as pl
from jax.experimental.pallas import tpu as pltpu

_LANE = 128


def _adaptive_mask_kernel(cv_ref, tmpl_ref, x_ref, o_ref, *, max_size, inv_ramp):
    # cv_ref   : VMEM (tile_rows, 1)       f32 -- current_val per (batch, head) row
    # tmpl_ref : VMEM (1, ml_tile)         f32 -- narrowed template tiled M times (column slice)
    # x_ref    : VMEM (tile_rows, ml_tile) x.dtype
    # o_ref    : VMEM (tile_rows, ml_tile) x.dtype
    mask = tmpl_ref[...] + cv_ref[...] * max_size          # broadcast -> (tile_rows, ml_tile) f32
    mask = mask * inv_ramp + 1.0
    mask = jnp.clip(mask, 0.0, 1.0)
    # Multiply in f32 (matches the torch reference, which upcasts), cast once on store.
    o_ref[...] = (x_ref[...].astype(jnp.float32) * mask).astype(o_ref.dtype)


def _pick_budgets():
    """Per-generation (target bytes per data block, scoped VMEM limit)."""
    try:
        phys_vmem = getattr(pltpu.get_tpu_info(), "vmem_capacity_bytes", 64 << 20)
    except Exception:
        phys_vmem = 64 << 20
    if phys_vmem >= (96 << 20):
        # v5e / v6e: 128 MiB physical VMEM -- bigger blocks, raised scoped limit.
        return 4 << 20, 64 << 20
    # v7x (or unknown): 64 MiB physical -- stay under the 32 MiB default scoped limit.
    return 2 << 20, 32 << 20


def adaptive_mask_forward(x, current_val, mask_template, *, max_size, ramp_size,
                          donate_x=False):
    """x: (B, H, M, L), L <= max_size; current_val: (H, 1, 1) or (1,)-broadcastable;
    mask_template: (max_size,). Returns (B, H, M, L) with x.dtype."""
    B, H, M, L = x.shape
    assert L <= max_size
    ML = M * L
    R = B * H

    # --- layout glue (tiny arrays only; x itself is just reshaped, no HBM copy) ---
    tmpl = mask_template.astype(jnp.float32)
    if L < max_size:
        tmpl = tmpl[max_size - L:]
    tmpl_ml = jnp.tile(tmpl, M)                           # (ML,) lane-axis mask pattern

    cv = current_val.astype(jnp.float32).reshape(-1)
    if cv.shape[0] == 1:
        cv = jnp.broadcast_to(cv, (H,))
    assert cv.shape[0] == H, "current_val must broadcast over heads"
    cv_rows = jnp.broadcast_to(cv.reshape(1, H), (B, H)).reshape(R, 1)

    x2 = x.reshape(R, ML)                                 # free contiguous reshape

    # --- per-generation block sizing ---------------------------------------------
    target_block, vmem_limit = _pick_budgets()
    itemsize = jnp.dtype(x.dtype).itemsize
    sub = max(8, 32 // itemsize)                          # sublane tile: 8/16/32 for 4/2/1-byte

    row_bytes = ML * itemsize
    if row_bytes <= target_block:
        # Whole rows fit in one block: tile only the collapsed (B*H) sublane axis.
        ml_tile = ML
        rows_fit = max(1, target_block // row_bytes)
        if rows_fit >= R or R <= sub:
            tile_rows = R
        else:
            tile_rows = max(sub, (rows_fit // sub) * sub)
    else:
        # A single row exceeds the budget: also tile the lane (M*L) axis in 128-multiples.
        tile_rows = min(R, sub)
        lanes_fit = max(1, target_block // (tile_rows * itemsize))
        ml_tile = max(_LANE, (lanes_fit // _LANE) * _LANE)
        ml_tile = min(ml_tile, ((ML + _LANE - 1) // _LANE) * _LANE)

    nr = pl.cdiv(R, tile_rows)                            # ragged tails handled by Pallas
    nc = pl.cdiv(ML, ml_tile)

    # Template sized to cover every column block (padded lanes are never written out).
    tmpl_cols = nc * ml_tile
    if tmpl_cols != ML:
        tmpl_ml = jnp.pad(tmpl_ml, (0, tmpl_cols - ML))
    tmpl2 = tmpl_ml.reshape(1, tmpl_cols)

    kernel = functools.partial(
        _adaptive_mask_kernel,
        max_size=float(max_size),
        inv_ramp=1.0 / float(ramp_size),
    )

    grid_spec = pltpu.PrefetchScalarGridSpec(
        num_scalar_prefetch=0,
        grid=(nr, nc),
        in_specs=[
            pl.BlockSpec((tile_rows, 1), lambda r, c: (r, 0)),        # per-row current_val
            pl.BlockSpec((1, ml_tile), lambda r, c: (0, c)),          # template column slice
            pl.BlockSpec((tile_rows, ml_tile), lambda r, c: (r, c)),  # x block
        ],
        out_specs=pl.BlockSpec((tile_rows, ml_tile), lambda r, c: (r, c)),
    )

    out = pl.pallas_call(
        kernel,
        out_shape=jax.ShapeDtypeStruct((R, ML), x.dtype),
        grid_spec=grid_spec,
        compiler_params=pltpu.CompilerParams(
            dimension_semantics=("parallel", "parallel"),
            vmem_limit_bytes=vmem_limit,
        ),
        # Optional in-place update of x's HBM buffer when the caller does not
        # reuse the unmasked attention weights.
        input_output_aliases={2: 0} if donate_x else {},
    )(cv_rows, tmpl2, x2)

    return out.reshape(B, H, M, L)


def adaptive_mask_reference(x, current_val, mask_template, *, max_size, ramp_size):
    mask = mask_template.astype(jnp.float32) + current_val.astype(jnp.float32) * max_size
    mask = mask / ramp_size + 1.0
    mask = jnp.clip(mask, 0.0, 1.0)
    L = x.shape[-1]
    if L < max_size:
        mask = mask[..., max_size - L:]
    return (x.astype(jnp.float32) * mask).astype(x.dtype)


if __name__ == "__main__":
    # Small shapes consistent with adaptive-span usage:
    #   attention weights x: (B, H, M, L), current_val shape (H, 1, 1).
    B, H, M = 2, 4, 8
    max_size = 16     # maximum span
    ramp_size = 8
    L = 16            # x.size(-1); here == max_size (the narrow path is also supported)

    key = jax.random.PRNGKey(0)
    x = jax.random.normal(key, (B, H, M, L), dtype=jnp.float32)

    # Deterministic parameter init (module default init_val=0 gives a trivial
    # all-masked output; use distinct per-head values to exercise the ramp).
    current_val = jnp.linspace(0.2, 0.9, H, dtype=jnp.float32).reshape(H, 1, 1)
    mask_template = jnp.linspace(1.0 - max_size, 0.0, max_size, dtype=jnp.float32)

    out = adaptive_mask_forward(
        x, current_val, mask_template, max_size=max_size, ramp_size=ramp_size
    )
    out = jax.block_until_ready(out)

    ref = adaptive_mask_reference(
        x, current_val, mask_template, max_size=max_size, ramp_size=ramp_size
    )
    assert out.shape == x.shape and out.dtype == x.dtype
    assert jnp.max(jnp.abs(out - ref)) < 1e-5

    print("KERNEL_OK")
</pallas_src>

<mosaic_0001>
module attributes {stable_mosaic.version = 11 : i64} {
  func.func @_adaptive_mask_kernel(%arg0: i32, %arg1: i32, %arg2: memref<8x1xf32, #tpu.memory_space<vmem>>, %arg3: memref<1x128xf32, #tpu.memory_space<vmem>>, %arg4: memref<8x128xf32, #tpu.memory_space<vmem>>, %arg5: memref<8x128xf32, #tpu.memory_space<vmem>>) attributes {dimension_semantics = [#tpu.dimension_semantics<parallel>, #tpu.dimension_semantics<parallel>], iteration_bounds = array<i64: 1, 1>, scalar_prefetch = 0 : i64, scratch_operands = 0 : i64, tpu.core_type = #tpu.core_type<tc>, window_params = [{transform_indices = @transform_0, window_bounds = array<i64: 8, 1>}, {transform_indices = @transform_1, window_bounds = array<i64: 1, 128>}, {transform_indices = @transform_2, window_bounds = array<i64: 8, 128>}, {transform_indices = @transform_3, window_bounds = array<i64: 8, 128>}]} {
    %c0 = arith.constant 0 : index
    %c0_0 = arith.constant 0 : index
    %0 = vector.load %arg3[%c0, %c0_0] : memref<1x128xf32, #tpu.memory_space<vmem>>, vector<1x128xf32>
    %c0_1 = arith.constant 0 : index
    %c0_2 = arith.constant 0 : index
    %1 = vector.load %arg2[%c0_1, %c0_2] : memref<8x1xf32, #tpu.memory_space<vmem>>, vector<8x1xf32>
    %cst = arith.constant 1.600000e+01 : f32
    %2 = vector.broadcast %cst : f32 to vector<8x1xf32>
    %3 = arith.mulf %1, %2 : vector<8x1xf32>
    %4 = vector.broadcast %0 : vector<1x128xf32> to vector<8x128xf32>
    %5 = vector.broadcast %3 : vector<8x1xf32> to vector<8x128xf32>
    %6 = arith.addf %4, %5 : vector<8x128xf32>
    %cst_3 = arith.constant 1.250000e-01 : f32
    %7 = vector.broadcast %cst_3 : f32 to vector<8x128xf32>
    %8 = arith.mulf %6, %7 : vector<8x128xf32>
    %cst_4 = arith.constant 1.000000e+00 : f32
    %9 = vector.broadcast %cst_4 : f32 to vector<8x128xf32>
    %10 = arith.addf %8, %9 : vector<8x128xf32>
    %cst_5 = arith.constant 0.000000e+00 : f32
    %cst_6 = arith.constant 1.000000e+00 : f32
    %11 = vector.broadcast %cst_5 : f32 to vector<8x128xf32>
    %12 = arith.maximumf %11, %10 : vector<8x128xf32>
    %13 = vector.broadcast %cst_6 : f32 to vector<8x128xf32>
    %14 = arith.minimumf %13, %12 : vector<8x128xf32>
    %c0_7 = arith.constant 0 : index
    %c0_8 = arith.constant 0 : index
    %15 = vector.load %arg4[%c0_7, %c0_8] : memref<8x128xf32, #tpu.memory_space<vmem>>, vector<8x128xf32>
    %16 = arith.mulf %15, %14 : vector<8x128xf32>
    %c0_9 = arith.constant 0 : index
    %c0_10 = arith.constant 0 : index
    %17 = vector.load %arg5[%c0_9, %c0_10] : memref<8x128xf32, #tpu.memory_space<vmem>>, vector<8x128xf32>
    tpu.vector_store %arg5[%c0_9, %c0_10], %16 {strides = array<i32>} : memref<8x128xf32, #tpu.memory_space<vmem>>, vector<8x128xf32>,
    return
  }
  func.func @transform_0(%arg0: i32, %arg1: i32) -> (i32, i32) {
    %c0_i32 = arith.constant 0 : i32
    %c0_i32_0 = arith.constant 0 : i32
    return %arg0, %c0_i32 : i32, i32
  }
  func.func @transform_1(%arg0: i32, %arg1: i32) -> (i32, i32) {
    %c0_i32 = arith.constant 0 : i32
    %c0_i32_0 = arith.constant 0 : i32
    return %c0_i32, %arg1 : i32, i32
  }
  func.func @transform_2(%arg0: i32, %arg1: i32) -> (i32, i32) {
    %c0_i32 = arith.constant 0 : i32
    return %arg0, %arg1 : i32, i32
  }
  func.func @transform_3(%arg0: i32, %arg1: i32) -> (i32, i32) {
    %c0_i32 = arith.constant 0 : i32
    return %arg0, %arg1 : i32, i32
  }
}

</mosaic_0001>

<llo_original>
// kernel: tpu_custom_call.1
$region0: #{tpu_custom_call.1}
  #allocation0 [shape = 'u32[]', space=smem, size = 0x4, offset = 0x4, fixed_abs, tag = 'smem constant byte address 0x4 - core index']
  #allocation1 [shape = 'u32[144,128]{1,0:T(1,128)}', space=vmem, size = 0x12000, scoped, tag = 'internal scratch']
  %s0 = inlined_call_operand.vmem [shape: f32[8,1], index: 0, kind: input, shape index: {}]
  %s1 = inlined_call_operand.vmem [shape: f32[1,128], index: 1, kind: input, shape index: {}]
  %s2 = inlined_call_operand.vmem [shape: f32[8,128], index: 2, kind: input, shape index: {}]
  %s3 = inlined_call_operand.hbm [shape: f32[8,128], index: 3, kind: output, shape index: {}]
  %s4 = sld [smem:[#allocation0]]
  $region22: #{tpu_custom_call.1} parent=0
    _
  %s6 = ssub.s32 1, %s4
  %s7 = scalar_select 0, %s6, %s4
  $region1: #{tpu_custom_call.1} parent=0
    #allocation2 [shape = 'u8[4096]{0}', space=vmem, size = 0x1000, scoped, tag = 'output window, operand 0, single buffered']
    #allocation3 [shape = 's32[1]{0}', space=sflag, size = 0x4, scoped, tag = 'scoped memory for tpu_custom_call.1']
    %8 = vsyncpa [#allocation3], 0
    // Predicated region
    $region2: #{tpu_custom_call.1} parent=1 // pred_check
      _
    $region3: #{tpu_custom_call.1} parent=1 // pred_check_branch
      %10 = sbr.rel (0) target = $region5
    $region4: #{tpu_custom_call.1} parent=1 // pred_region
      _
    $region5: #{tpu_custom_call.1} parent=1 // pred_fallthru
      _
    // Predicated region
    $region6: #{tpu_custom_call.1} parent=1 // pred_check
      _
    $region7: #{tpu_custom_call.1} parent=1 // pred_check_branch
      %12 = sbr.rel (0) target = $region9
    $region8: #{tpu_custom_call.1} parent=1 // pred_region
      _
    $region9: #{tpu_custom_call.1} parent=1 // pred_fallthru
      _
    // Predicated region
    $region10: #{tpu_custom_call.1} parent=1 // pred_check
      _
    $region11: #{tpu_custom_call.1} parent=1 // pred_check_branch
      %14 = sbr.rel (0) target = $region13
    $region12: #{tpu_custom_call.1} parent=1 // pred_region
      _
    $region13: #{tpu_custom_call.1} parent=1 // pred_fallthru
      _
    %v15 = vld [vmem:[%s1] sm:$0x1]
    %v16 = vld [vmem:[%s0] sm:$0xff]
    %v17 = vmul.f32 %v16, 16.0
    %v19 = vlaneseq
    %v20 = vshrl.u32 %v19, 7
    %v21 = vsub.s32 0, %v20
    %v22 = vrot.slane %v15, %v21
    %25 = vset.pattern.permute.xlu0 0
    %26 = vperm.xlu0 %25, %v17
    %v27 = vpop.permute.xlu0 %26
    %v29 = vadd.f32 %v22, %v27
    %v30 = vmul.f32 %v29, 0.125
    %v31 = vadd.f32 %v30, 1.0
    %v32 = vmax.f32 %v31, 0.0
    %v33 = vmin.f32 %v32, 1.0
    %v34 = vld [vmem:[%s2] sm:$0xff]
    %v35 = vmul.f32 %v34, %v33
    %36 = vst [vmem:[#allocation2] sm:$0xff] %v35
    // Predicated region
    $region14: #{tpu_custom_call.1} parent=1 // pred_check
      _
    $region15: #{tpu_custom_call.1} parent=1 // pred_check_branch
      %38 = sbr.rel (0) target = $region17
    $region16: #{tpu_custom_call.1} parent=1 // pred_region
      %s40 = ssub.s32 128, 128
      %41 = vsyncadd [#allocation3], %s40
      %s43 = sshll.u32 [#allocation2], 4
      %s44 = int_to_ptr.vmem [resolvable:$true] %s43
      %46 = dma.vmem_to_hbm [thread:$0]  %s44, 128, %s3, [#allocation3]
    $region17: #{tpu_custom_call.1} parent=1 // pred_fallthru
      _
    // Predicated region
    $region18: #{tpu_custom_call.1} parent=1 // pred_check
      _
    $region19: #{tpu_custom_call.1} parent=1 // pred_check_branch
      %48 = sbr.rel (0) target = $region21
    $region20: #{tpu_custom_call.1} parent=1 // pred_region
      %49 = dma.done [#allocation3], 128
    $region21: #{tpu_custom_call.1} parent=1 // pred_fallthru
      _
    %50 = vsyncpa [#allocation3], 1

</llo_original>
